<compile_context>
chip_gen: v7x
topology: tpu7x:2x2x1
jax: 0.10.0
libtpu: 0.0.40
codegen_flags: <defaults>
</compile_context>

<pallas_src>
import jax
import jax.numpy as jnp
from jax.experimental import pallas as pl
from jax.experimental.pallas import tpu as pltpu


def _smooth_sigmoid_kernel(params_ref, x_ref, o_ref):
    # params_ref: SMEM (2,) f32 scalar-prefetch array -> [scale, k]
    # x_ref / o_ref: (block_rows, lane) VMEM tiles.
    half_scale = 0.5 * params_ref[0]          # scalar (SMEM) math, free
    half_k = 0.5 * params_ref[1]
    x = x_ref[...].astype(jnp.float32)
    # Single-transcendental sigmoid: scale*sigmoid(z) = s/2 * tanh(z/2) + s/2.
    y = half_scale * jnp.tanh(half_k * x) + half_scale
    o_ref[...] = y.astype(o_ref.dtype)


def smooth_sigmoid(x, scale, k=1.0):
    """scale * sigmoid(k * x), elementwise. x: any shape (e.g. NCHW)."""
    orig_shape = x.shape
    orig_dtype = x.dtype
    n = x.size
    itemsize = jnp.dtype(orig_dtype).itemsize

    LANE = 128
    MAX_LANE = 2048

    if n % LANE == 0:
        # No pad / slice round-trips: reshape of a contiguous array is free.
        lane = LANE
        while lane * 2 <= MAX_LANE and n % (lane * 2) == 0:
            lane *= 2
        n_eff = n
        x2d = x.reshape(n // lane, lane)
        padded = False
    else:
        # Rare fallback when the total element count is not 128-aligned.
        lane = LANE
        tile = 8 * lane
        n_eff = ((n + tile - 1) // tile) * tile
        x2d = jnp.pad(x.reshape(-1), (0, n_eff - n)).reshape(n_eff // lane, lane)
        padded = True

    rows = x2d.shape[0]

    # Row-block size targeting ~2 MiB per buffer (Pallas double-buffers each of
    # the 2 arrays -> ~8 MiB VMEM, well under the scoped limit), rounded to a
    # multiple of the dtype's sublane packing (8 for f32, 16 bf16, 32 int8/fp8).
    sublane_mult = 8 * max(1, 4 // itemsize)
    target_bytes = 2 << 20
    block_rows = (target_bytes // (lane * itemsize) // sublane_mult) * sublane_mult
    block_rows = max(sublane_mult, block_rows)
    if block_rows >= rows:
        block_rows = rows  # full-extent block is always layout-legal
    grid = (pl.cdiv(rows, block_rows),)

    params = jnp.asarray([scale, k], dtype=jnp.float32)

    out2d = pl.pallas_call(
        _smooth_sigmoid_kernel,
        out_shape=jax.ShapeDtypeStruct((rows, lane), orig_dtype),
        grid_spec=pltpu.PrefetchScalarGridSpec(
            num_scalar_prefetch=1,
            grid=grid,
            in_specs=[pl.BlockSpec((block_rows, lane), lambda i, p: (i, 0))],
            out_specs=pl.BlockSpec((block_rows, lane), lambda i, p: (i, 0)),
        ),
        compiler_params=pltpu.CompilerParams(
            dimension_semantics=("parallel",)),
        cost_estimate=pl.CostEstimate(
            flops=4 * n_eff,
            transcendentals=n_eff,
            bytes_accessed=2 * n_eff * itemsize),
    )(params, x2d)

    if padded:
        return out2d.reshape(-1)[:n].reshape(orig_shape)
    return out2d.reshape(orig_shape)


if __name__ == "__main__":
    key = jax.random.PRNGKey(0)
    # Small NCHW input consistent with a PINN feature map.
    x = jax.random.normal(key, (2, 4, 16, 16), dtype=jnp.float32)

    # Deterministic parameter init matching nn.Parameter(torch.tensor(1.0)).
    scale = jnp.float32(1.0)
    k = 1.0  # slope

    out = smooth_sigmoid(x, scale, k)
    out = jax.block_until_ready(out)

    # Reference check in plain JAX (matches the torch forward exactly).
    ref = scale * (1.0 / (1.0 + jnp.exp(-k * x)))
    assert out.shape == x.shape and out.dtype == x.dtype
    assert jnp.max(jnp.abs(out - ref)) < 1e-5

    print("KERNEL_OK")
</pallas_src>

<mosaic_0001>
module attributes {stable_mosaic.version = 11 : i64} {
  func.func @_smooth_sigmoid_kernel(%arg0: i32, %arg1: memref<2xf32, #tpu.memory_space<smem>>, %arg2: memref<1x2048xf32, #tpu.memory_space<vmem>>, %arg3: memref<1x2048xf32, #tpu.memory_space<vmem>>) attributes {dimension_semantics = [#tpu.dimension_semantics<parallel>], iteration_bounds = array<i64: 1>, scalar_prefetch = 1 : i64, scratch_operands = 0 : i64, tpu.core_type = #tpu.core_type<tc>, window_params = [{transform_indices = @transform_0, window_bounds = array<i64: 1, 2048>}, {transform_indices = @transform_1, window_bounds = array<i64: 1, 2048>}]} {
    %c0 = arith.constant 0 : index
    %0 = memref.load %arg1[%c0] : memref<2xf32, #tpu.memory_space<smem>>
    %cst = arith.constant 5.000000e-01 : f32
    %1 = arith.mulf %cst, %0 : f32
    %c1 = arith.constant 1 : index
    %2 = memref.load %arg1[%c1] : memref<2xf32, #tpu.memory_space<smem>>
    %cst_0 = arith.constant 5.000000e-01 : f32
    %3 = arith.mulf %cst_0, %2 : f32
    %c0_1 = arith.constant 0 : index
    %c0_2 = arith.constant 0 : index
    %4 = vector.load %arg2[%c0_1, %c0_2] : memref<1x2048xf32, #tpu.memory_space<vmem>>, vector<1x2048xf32>
    %5 = vector.broadcast %3 : f32 to vector<1x2048xf32>
    %6 = arith.mulf %5, %4 : vector<1x2048xf32>
    %7 = math.tanh %6 : vector<1x2048xf32>
    %8 = vector.broadcast %1 : f32 to vector<1x2048xf32>
    %9 = arith.mulf %8, %7 : vector<1x2048xf32>
    %10 = vector.broadcast %1 : f32 to vector<1x2048xf32>
    %11 = arith.addf %9, %10 : vector<1x2048xf32>
    %c0_3 = arith.constant 0 : index
    %c0_4 = arith.constant 0 : index
    %12 = vector.load %arg3[%c0_3, %c0_4] : memref<1x2048xf32, #tpu.memory_space<vmem>>, vector<1x2048xf32>
    tpu.vector_store %arg3[%c0_3, %c0_4], %11 {strides = array<i32>} : memref<1x2048xf32, #tpu.memory_space<vmem>>, vector<1x2048xf32>,
    return
  }
  func.func @transform_0(%arg0: i32, %arg1: memref<2xf32, #tpu.memory_space<smem>>) -> (i32, i32) {
    %c0_i32 = arith.constant 0 : i32
    %c0_i32_0 = arith.constant 0 : i32
    return %arg0, %c0_i32 : i32, i32
  }
  func.func @transform_1(%arg0: i32, %arg1: memref<2xf32, #tpu.memory_space<smem>>) -> (i32, i32) {
    %c0_i32 = arith.constant 0 : i32
    %c0_i32_0 = arith.constant 0 : i32
    return %arg0, %c0_i32 : i32, i32
  }
}

</mosaic_0001>

<llo_original>
// kernel: tpu_custom_call.1
$region0: #{tpu_custom_call.1}
  #allocation0 [shape = 'u32[]', space=smem, size = 0x4, offset = 0x4, fixed_abs, tag = 'smem constant byte address 0x4 - core index']
  #allocation1 [shape = 'u32[144,128]{1,0:T(1,128)}', space=vmem, size = 0x12000, scoped, tag = 'internal scratch']
  #allocation2 [shape = 's32[1]{0}', space=sflag, size = 0x4, scoped, tag = 'scoped memory for tpu_custom_call.1']
  #allocation3 [shape = 'u8[512]{0}', space=smem, size = 0x200, scoped, tag = 'prefetched SMEM operand 0']
  %s0 = inlined_call_operand.hbm [shape: f32[2], index: 0, kind: input, shape index: {}]
  %s1 = inlined_call_operand.hbm [shape: f32[1,2048], index: 1, kind: input, shape index: {}]
  %s2 = inlined_call_operand.hbm [shape: f32[1,2048], index: 2, kind: output, shape index: {}]
  %s3 = sld [smem:[#allocation0]]
  $region18: #{tpu_custom_call.1} parent=0
    _
  %s5 = ssub.s32 1, %s3
  %s6 = scalar_select 0, %s5, %s3
  %8 = dma.hbm_to_smem %s0, 16, [#allocation3], [#allocation2]
  %9 = dma.done [#allocation2], 16
  %10 = sfence
  $region1: #{tpu_custom_call.1} parent=0
    #allocation4 [shape = 'u8[8192]{0}', space=vmem, size = 0x2000, scoped, tag = 'input window, operand 1, single buffered']
    #allocation5 [shape = 's32[1]{0}', space=sflag, size = 0x4, scoped, tag = 'scoped memory for tpu_custom_call.1']
    #allocation6 [shape = 's32[1]{0}', space=sflag, size = 0x4, scoped, tag = 'scoped memory for tpu_custom_call.1']
    #allocation7 [shape = 'u8[8192]{0}', space=vmem, size = 0x2000, scoped, tag = 'output window, operand 0, single buffered']
    %11 = vsyncpa [#allocation5], 0
    %12 = vsyncpa [#allocation6], 0
    // Predicated region
    $region2: #{tpu_custom_call.1} parent=1 // pred_check
      _
    $region3: #{tpu_custom_call.1} parent=1 // pred_check_branch
      %14 = sbr.rel (0) target = $region5
    $region4: #{tpu_custom_call.1} parent=1 // pred_region
      %s16 = ssub.s32 256, 256
      %17 = vsyncadd [#allocation5], %s16
      %s19 = sshll.u32 [#allocation4], 4
      %s20 = int_to_ptr.vmem [resolvable:$true] %s19
      %22 = dma.hbm_to_vmem [thread:$0]  %s1, 256, %s20, [#allocation5]
    $region5: #{tpu_custom_call.1} parent=1 // pred_fallthru
      _
    // Predicated region
    $region6: #{tpu_custom_call.1} parent=1 // pred_check
      _
    $region7: #{tpu_custom_call.1} parent=1 // pred_check_branch
      %24 = sbr.rel (0) target = $region9
    $region8: #{tpu_custom_call.1} parent=1 // pred_region
      %25 = dma.done [#allocation5], 256
    $region9: #{tpu_custom_call.1} parent=1 // pred_fallthru
      _
    %s26 = sld [smem:[#allocation3]]
    %s27 = smul.f32 %s26, 0.5
    %s28 = sld [smem:[#allocation3 + $0x1]]
    %s29 = smul.f32 %s28, 0.5
    %v30 = vld [vmem:[#allocation4] sm:$0xff]
    %v31 = vld [vmem:[#allocation4 + $0x8] sm:$0xff]
    %v32 = vstv %s29
    %v33 = vmul.f32 %v32, %v30
    %v34 = vmul.f32 %v32, %v31
    %v35 = vtanh.pop %v33
    %v36 = vtanh.pop %v34
    %v37 = vstv %s27
    %v38 = vmul.f32 %v37, %v35
    %v39 = vmul.f32 %v37, %v36
    %v40 = vadd.f32 %v38, %v37
    %v41 = vadd.f32 %v39, %v37
    %42 = vst [vmem:[#allocation7] sm:$0xff] %v40
    %43 = vst [vmem:[#allocation7 + $0x8] sm:$0xff] %v41
    // Predicated region
    $region10: #{tpu_custom_call.1} parent=1 // pred_check
      _
    $region11: #{tpu_custom_call.1} parent=1 // pred_check_branch
      %45 = sbr.rel (0) target = $region13
    $region12: #{tpu_custom_call.1} parent=1 // pred_region
      %s47 = ssub.s32 256, 256
      %48 = vsyncadd [#allocation6], %s47
      %s50 = sshll.u32 [#allocation7], 4
      %s51 = int_to_ptr.vmem [resolvable:$true] %s50
      %53 = dma.vmem_to_hbm [thread:$0]  %s51, 256, %s2, [#allocation6]
    $region13: #{tpu_custom_call.1} parent=1 // pred_fallthru
      _
    // Predicated region
    $region14: #{tpu_custom_call.1} parent=1 // pred_check
      _
    $region15: #{tpu_custom_call.1} parent=1 // pred_check_branch
      %55 = sbr.rel (0) target = $region17
    $region16: #{tpu_custom_call.1} parent=1 // pred_region
      %56 = dma.done [#allocation6], 256
    $region17: #{tpu_custom_call.1} parent=1 // pred_fallthru
      _
    %57 = vsyncpa [#allocation5], 1
    %58 = vsyncpa [#allocation6], 1

</llo_original>
